<compile_context>
chip_gen: v6e
topology: v6e:2x2x1
jax: 0.10.0
libtpu: 0.0.40
codegen_flags: <defaults>
</compile_context>

<pallas_src>
import functools

import jax
import jax.numpy as jnp
from jax.experimental import pallas as pl
from jax.experimental.pallas import tpu as pltpu

KERNEL_SIZE = 25
STRIDE = 1


def _moving_avg_kernel(x_ref, o_ref, *, kernel_size, pad, seq_len, n_win):
    """One (block_b, L) row block: fused edge-replicate pad + window mean."""
    tb = x_ref.shape[0]
    x = x_ref[...].astype(jnp.float32)                            # (TB, L)

    # Edge-replicated padded row, built directly in registers (no scratch,
    # no zero fill, no analytic edge correction needed afterwards).
    if pad > 0:
        left = jnp.broadcast_to(x[:, 0:1], (tb, pad))
        right = jnp.broadcast_to(x[:, seq_len - 1:seq_len], (tb, pad))
        xp = jnp.concatenate([left, x, right], axis=1)            # (TB, L + 2*pad)
    else:
        xp = x
    padded_len = seq_len + 2 * pad

    # Sliding-window sum of width kernel_size via logarithmic doubling.
    #   cur[:, m] == sum_{t < w} xp[:, m + t]   (valid width = padded_len - w + 1)
    # Each power-of-two present in kernel_size's binary decomposition is added
    # into `acc` the moment it is produced, keeping <= 3 full-width f32
    # temporaries live at any point.
    acc = None
    cur = xp
    w = 1
    cw = padded_len              # current valid width of `cur`
    offset = 0                   # lane offset of the next consumed segment
    rem = kernel_size
    while True:
        if rem & 1:
            term = cur[:, offset:offset + n_win]
            acc = term if acc is None else acc + term
            offset += w
        rem >>= 1
        if rem == 0:
            break
        nw = cw - w
        cur = cur[:, :nw] + cur[:, w:cw]
        cw = nw
        w *= 2

    o_ref[...] = (acc * (1.0 / kernel_size)).astype(o_ref.dtype)


def _choose_block_b(b, l, pad, itemsize):
    """Row-block (sublane) tile size derived from a VMEM byte budget."""
    if b <= 8:
        return b
    padded_len = l + 2 * pad
    # Per-row bytes: double-buffered input + output blocks (pipeline) plus
    # ~4 live full-width f32 temporaries inside the kernel body.
    per_row = 2 * l * itemsize + 2 * l * itemsize + 4 * 4 * padded_len
    budget = 6 << 20                       # ~6 MiB working set
    blk = budget // max(per_row, 1)
    blk = min(blk, (b + 1) // 2)           # grid >= 2: overlap DMA, feed both v7x TCs
    blk = max(8, (blk // 8) * 8)           # whole sublane (8-row) tiles
    return int(min(blk, b))


def moving_avg(x, kernel_size=KERNEL_SIZE, stride=STRIDE, *, block_b=None):
    """Replicated-edge moving average over the last axis of a (B, L) array."""
    assert x.ndim == 2, "expected (batch, length)"
    b, l = x.shape
    pad = (kernel_size - 1) // 2
    padded_len = l + 2 * pad
    n_win = padded_len - kernel_size + 1          # stride-1 window count (== L for odd K)
    assert n_win >= 1

    if block_b is None:
        block_b = _choose_block_b(b, l, pad, x.dtype.itemsize)
    block_b = min(block_b, b)
    if block_b != b and block_b % 8 != 0:
        block_b = max(8, (block_b // 8) * 8)
    grid = (pl.cdiv(b, block_b),)

    kernel = functools.partial(
        _moving_avg_kernel,
        kernel_size=kernel_size, pad=pad, seq_len=l, n_win=n_win)

    y = pl.pallas_call(
        kernel,
        out_shape=jax.ShapeDtypeStruct((b, n_win), x.dtype),
        grid=grid,
        in_specs=[pl.BlockSpec((block_b, l), lambda i: (i, 0))],
        out_specs=pl.BlockSpec((block_b, n_win), lambda i: (i, 0)),
        compiler_params=pltpu.CompilerParams(
            dimension_semantics=("parallel",),
            vmem_limit_bytes=48 * 1024 * 1024),
    )(x)

    if stride != 1:
        # TODO(synk): fold stride into the kernel's output path instead of
        # subsampling the stride-1 result here (extra HBM pass for stride > 1).
        y = y[:, ::stride]
    return y


def _reference(x, kernel_size=KERNEL_SIZE, stride=STRIDE):
    pad = (kernel_size - 1) // 2
    xpad = jnp.concatenate(
        [jnp.repeat(x[:, :1], pad, axis=1), x, jnp.repeat(x[:, -1:], pad, axis=1)],
        axis=1)
    n = (xpad.shape[1] - kernel_size) // stride + 1
    cols = [xpad[:, j * stride:j * stride + kernel_size].mean(axis=1) for j in range(n)]
    return jnp.stack(cols, axis=1)


if __name__ == "__main__":
    key = jax.random.PRNGKey(0)

    # Two small (B, L) cases: one whose batch divides the row block evenly and
    # one that leaves a partial last row-block (exercises edge-block masking).
    for (B, L) in [(16, 64), (20, 96)]:
        xk = jax.random.fold_in(key, B * 1000 + L)
        x = jax.random.normal(xk, (B, L), dtype=jnp.float32)

        y = jax.block_until_ready(moving_avg(x))
        y_ref = _reference(x)

        assert y.shape == y_ref.shape == (B, L), (y.shape, y_ref.shape)
        assert jnp.allclose(y, y_ref, atol=1e-5, rtol=1e-5), "mismatch vs reference"

    print("KERNEL_OK")
</pallas_src>

<mosaic_0001>
module attributes {stable_mosaic.version = 11 : i64} {
  func.func @_moving_avg_kernel(%arg0: i32, %arg1: memref<8x64xf32, #tpu.memory_space<vmem>>, %arg2: memref<8x64xf32, #tpu.memory_space<vmem>>) attributes {dimension_semantics = [#tpu.dimension_semantics<parallel>], iteration_bounds = array<i64: 2>, scalar_prefetch = 0 : i64, scratch_operands = 0 : i64, tpu.core_type = #tpu.core_type<tc>, window_params = [{transform_indices = @transform_0, window_bounds = array<i64: 8, 64>}, {transform_indices = @transform_1, window_bounds = array<i64: 8, 64>}]} {
    %c0 = arith.constant 0 : index
    %c0_0 = arith.constant 0 : index
    %0 = vector.load %arg1[%c0, %c0_0] : memref<8x64xf32, #tpu.memory_space<vmem>>, vector<8x64xf32>
    %1 = vector.extract_strided_slice %0 {offsets = [0, 0], sizes = [8, 1], strides = [1, 1]} : vector<8x64xf32> to vector<8x1xf32>
    %2 = vector.shape_cast %1 : vector<8x1xf32> to vector<8x1xf32>
    %3 = vector.broadcast %2 : vector<8x1xf32> to vector<8x12xf32>
    %4 = vector.extract_strided_slice %0 {offsets = [0, 63], sizes = [8, 1], strides = [1, 1]} : vector<8x64xf32> to vector<8x1xf32>
    %5 = vector.shape_cast %4 : vector<8x1xf32> to vector<8x1xf32>
    %6 = vector.broadcast %5 : vector<8x1xf32> to vector<8x12xf32>
    %7 = tpu.concatenate %3, %0, %6 in 1 : vector<8x12xf32>, vector<8x64xf32>, vector<8x12xf32> -> vector<8x88xf32>
    %8 = vector.extract_strided_slice %7 {offsets = [0, 0], sizes = [8, 64], strides = [1, 1]} : vector<8x88xf32> to vector<8x64xf32>
    %9 = vector.extract_strided_slice %7 {offsets = [0, 0], sizes = [8, 87], strides = [1, 1]} : vector<8x88xf32> to vector<8x87xf32>
    %10 = vector.extract_strided_slice %7 {offsets = [0, 1], sizes = [8, 87], strides = [1, 1]} : vector<8x88xf32> to vector<8x87xf32>
    %11 = arith.addf %9, %10 : vector<8x87xf32>
    %12 = vector.extract_strided_slice %11 {offsets = [0, 0], sizes = [8, 85], strides = [1, 1]} : vector<8x87xf32> to vector<8x85xf32>
    %13 = vector.extract_strided_slice %11 {offsets = [0, 2], sizes = [8, 85], strides = [1, 1]} : vector<8x87xf32> to vector<8x85xf32>
    %14 = arith.addf %12, %13 : vector<8x85xf32>
    %15 = vector.extract_strided_slice %14 {offsets = [0, 0], sizes = [8, 81], strides = [1, 1]} : vector<8x85xf32> to vector<8x81xf32>
    %16 = vector.extract_strided_slice %14 {offsets = [0, 4], sizes = [8, 81], strides = [1, 1]} : vector<8x85xf32> to vector<8x81xf32>
    %17 = arith.addf %15, %16 : vector<8x81xf32>
    %18 = vector.extract_strided_slice %17 {offsets = [0, 1], sizes = [8, 64], strides = [1, 1]} : vector<8x81xf32> to vector<8x64xf32>
    %19 = arith.addf %8, %18 : vector<8x64xf32>
    %20 = vector.extract_strided_slice %17 {offsets = [0, 0], sizes = [8, 73], strides = [1, 1]} : vector<8x81xf32> to vector<8x73xf32>
    %21 = vector.extract_strided_slice %17 {offsets = [0, 8], sizes = [8, 73], strides = [1, 1]} : vector<8x81xf32> to vector<8x73xf32>
    %22 = arith.addf %20, %21 : vector<8x73xf32>
    %23 = vector.extract_strided_slice %22 {offsets = [0, 9], sizes = [8, 64], strides = [1, 1]} : vector<8x73xf32> to vector<8x64xf32>
    %24 = arith.addf %19, %23 : vector<8x64xf32>
    %cst = arith.constant 4.000000e-02 : f32
    %25 = vector.broadcast %cst : f32 to vector<8x64xf32>
    %26 = arith.mulf %24, %25 : vector<8x64xf32>
    %c0_1 = arith.constant 0 : index
    %c0_2 = arith.constant 0 : index
    %27 = vector.load %arg2[%c0_1, %c0_2] : memref<8x64xf32, #tpu.memory_space<vmem>>, vector<8x64xf32>
    tpu.vector_store %arg2[%c0_1, %c0_2], %26 {strides = array<i32>} : memref<8x64xf32, #tpu.memory_space<vmem>>, vector<8x64xf32>,
    return
  }
  func.func @transform_0(%arg0: i32) -> (i32, i32) {
    %c0_i32 = arith.constant 0 : i32
    %c0_i32_0 = arith.constant 0 : i32
    return %arg0, %c0_i32 : i32, i32
  }
  func.func @transform_1(%arg0: i32) -> (i32, i32) {
    %c0_i32 = arith.constant 0 : i32
    %c0_i32_0 = arith.constant 0 : i32
    return %arg0, %c0_i32 : i32, i32
  }
}

</mosaic_0001>

<llo_original>
// kernel: tpu_custom_call.1
$region0: #{tpu_custom_call.1}
  #allocation0 [shape = 'u32[]', space=smem, size = 0x4, offset = 0x4, fixed_abs, tag = 'smem constant byte address 0x4 - core index']
  #allocation1 [shape = 'u32[144,128]{1,0:T(1,128)}', space=vmem, size = 0x12000, scoped, tag = 'internal scratch']
  %s0 = inlined_call_operand.hbm [shape: f32[16,64], index: 0, kind: input, shape index: {}]
  %s1 = inlined_call_operand.hbm [shape: f32[16,64], index: 1, kind: output, shape index: {}]
  %s2 = sld [smem:[#allocation0]]
  $region41: #{tpu_custom_call.1} parent=0
    _
  %s4 = ssub.s32 1, %s2
  %s5 = scalar_select 0, %s4, %s2
  $region1: #{tpu_custom_call.1} parent=0
    #allocation2 [shape = 'u8[8192]{0}', space=vmem, size = 0x2000, scoped, tag = 'input window, operand 0']
    #allocation3 [shape = 's32[2]{0}', space=sflag, size = 0x8, scoped, tag = 'scoped memory for tpu_custom_call.1']
    #allocation4 [shape = 's32[2]{0}', space=sflag, size = 0x8, scoped, tag = 'scoped memory for tpu_custom_call.1']
    #allocation5 [shape = 'u8[8192]{0}', space=vmem, size = 0x2000, scoped, tag = 'output window, operand 0']
    %6 = vsyncpa [#allocation3], 0
    %s7 = scalar_lea.sflag [#allocation3], 1
    %8 = vsyncpa %s7, 0
    %9 = vsyncpa [#allocation4], 0
    %s10 = scalar_lea.sflag [#allocation4], 1
    %11 = vsyncpa %s10, 0
    loop: start=0, step=1, limit=4
    $region2: #{tpu_custom_call.1} parent=1 // loop_pre_header
      _
    $region3: #{tpu_custom_call.1} parent=1 // loop_header
      %s13 = sphi 0, %s17
      %p14 = scmp.ge.s32.totalorder %s13, 4
      %s23 = sphi 0, %s25
      %s26 = sphi 0, %s23
      %s27 = sphi 0, %s26
      %s43 = sphi 0, %s27
      %s49 = sphi 0, %s51
      %s52 = sphi 0, %s49
      %s53 = sphi 0, %s52
      %s69 = sphi 0, %s53
    $region4: #{tpu_custom_call.1} parent=1 // loop_header_branch
      %16 = sbr.rel (%p14) target = $region8
    $region5: #{tpu_custom_call.1} parent=1 // loop_body
      %s18 = ssub.s32 %s13, 1
      %s19 = ssub.s32 %s13, 2
      %s20 = sadd.s32 %s13, 1
      %s21 = ssub.s32 %s13, %s20
      %p22 = scmp.eq.s32.totalorder %s21, 0
      %s24 = sadd.s32 %s23, 1
      %s25 = scalar_select %p22, %s23, %s24
      %p28 = pneg %p22
      %p29 = scmp.eq.s32.totalorder %s13, 1
      %p30 = por %p28, %p29
      %p31 = scmp.ne.s32.totalorder %s23, %s26
      %p32 = scmp.eq.s32.totalorder %s13, 0
      %p33 = por %p31, %p32
      %p34 = scmp.ne.s32.totalorder %s23, %s26
      %p35 = scmp.eq.s32.totalorder %s18, 1
      %p36 = por %p34, %p35
      %p37 = scmp.ne.s32.totalorder %s26, %s27
      %p38 = scmp.eq.s32.totalorder %s18, 0
      %p39 = por %p37, %p38
      %p40 = scmp.ne.s32.totalorder %s26, %s27
      %p41 = scmp.eq.s32.totalorder %s19, 1
      %p42 = por %p40, %p41
      %p44 = scmp.ne.s32.totalorder %s27, %s43
      %p45 = scmp.eq.s32.totalorder %s19, 0
      %p46 = por %p44, %p45
      %s47 = ssub.s32 %s13, %s20
      %p48 = scmp.eq.s32.totalorder %s47, 0
      %s50 = sadd.s32 %s49, 1
      %s51 = scalar_select %p48, %s49, %s50
      %p54 = pneg %p48
      %p55 = scmp.eq.s32.totalorder %s13, 1
      %p56 = por %p54, %p55
      %p57 = scmp.ne.s32.totalorder %s49, %s52
      %p58 = scmp.eq.s32.totalorder %s13, 0
      %p59 = por %p57, %p58
      %p60 = scmp.ne.s32.totalorder %s49, %s52
      %p61 = scmp.eq.s32.totalorder %s18, 1
      %p62 = por %p60, %p61
      %p63 = scmp.ne.s32.totalorder %s52, %s53
      %p64 = scmp.eq.s32.totalorder %s18, 0
      %p65 = por %p63, %p64
      %p66 = scmp.ne.s32.totalorder %s52, %s53
      %p67 = scmp.eq.s32.totalorder %s19, 1
      %p68 = por %p66, %p67
      %p70 = scmp.ne.s32.totalorder %s53, %s69
      %p71 = scmp.eq.s32.totalorder %s19, 0
      %p72 = por %p70, %p71
      %p73 = scmp.le.s32.totalorder 1, %s13
      %p74 = scmp.lt.s32.totalorder %s13, 3
      %p75 = pnand %p73, %p74
      %p76 = pneg %p75
      // Predicated region
      $region9: #{tpu_custom_call.1} parent=5 // pred_check
        _
      $region10: #{tpu_custom_call.1} parent=5 // pred_check_branch
        %78 = sbr.rel (%p75) target = $region12
      $region11: #{tpu_custom_call.1} parent=5 // pred_region
        %s79 = ssub.s32 %s13, 1
      $region12: #{tpu_custom_call.1} parent=5 // pred_fallthru
        _
      %p80 = scmp.lt.s32.totalorder %s13, 2
      // Predicated region
      $region13: #{tpu_custom_call.1} parent=5 // pred_check
        %p81 = pneg %p80
      $region14: #{tpu_custom_call.1} parent=5 // pred_check_branch
        %83 = sbr.rel (%p81) target = $region16
      $region15: #{tpu_custom_call.1} parent=5 // pred_region
        // Predicated region
        $region17: #{tpu_custom_call.1} parent=15 // pred_check
          %p84 = pneg %p33
        $region18: #{tpu_custom_call.1} parent=15 // pred_check_branch
          %86 = sbr.rel (%p84) target = $region20
        $region19: #{tpu_custom_call.1} parent=15 // pred_region
          %s87 = sand.u32 %s23, 1
          %s88 = scalar_lea.sflag [#allocation3], %s87
          %s89 = sand.u32 %s23, 1
          %s90 = smul.addr %s89, 8
          %s91 = scalar_lea.vmem [#allocation2], %s90
          %s93 = ssub.s32 128, 128
          %94 = vsyncadd %s88, %s93
          %s95 = smul.addr %s13, 128
          %s96 = scalar_lea.hbm %s0, %s95
          %s98 = sshll.u32 %s91, 4
          %s99 = int_to_ptr.vmem [resolvable:$true] %s98
          %101 = dma.hbm_to_vmem [thread:$0]  %s96, 128, %s99, %s88
        $region20: #{tpu_custom_call.1} parent=15 // pred_fallthru
          _
      $region16: #{tpu_custom_call.1} parent=5 // pred_fallthru
        _
      %p102 = scmp.le.s32.totalorder 1, %s13
      %p103 = scmp.lt.s32.totalorder %s13, 3
      %p104 = pnand %p102, %p103
      %p105 = pneg %p104
      // Predicated region
      $region21: #{tpu_custom_call.1} parent=5 // pred_check
        _
      $region22: #{tpu_custom_call.1} parent=5 // pred_check_branch
        %107 = sbr.rel (%p104) target = $region24
      $region23: #{tpu_custom_call.1} parent=5 // pred_region
        %s108 = ssub.s32 %s13, 1
        %s109 = sand.u32 %s26, 1
        %s110 = scalar_lea.sflag [#allocation3], %s109
        %s111 = sand.u32 %s26, 1
        %s112 = smul.addr %s111, 8
        %s113 = scalar_lea.vmem [#allocation2], %s112
        // Predicated region
        $region25: #{tpu_custom_call.1} parent=23 // pred_check
          %p114 = pneg %p39
        $region26: #{tpu_custom_call.1} parent=23 // pred_check_branch
          %116 = sbr.rel (%p114) target = $region28
        $region27: #{tpu_custom_call.1} parent=23 // pred_region
          %117 = dma.done %s110, 128
        $region28: #{tpu_custom_call.1} parent=23 // pred_fallthru
          _
        %s118 = sand.u32 %s26, 1
        %s119 = scalar_lea.sflag [#allocation3], %s118
        %s120 = sand.u32 %s26, 1
        %s121 = smul.addr %s120, 8
        %s122 = scalar_lea.vmem [#allocation2], %s121
        %p123 = pneg %p39
        %p124 = pneg %p36
        %p125 = pneg %p65
        %p126 = pneg %p62
        %s127 = sand.u32 %s52, 1
        %s128 = scalar_lea.sflag [#allocation4], %s127
        %s129 = sand.u32 %s52, 1
        %s130 = smul.addr %s129, 8
        %s131 = scalar_lea.vmem [#allocation5], %s130
        %v132 = vld [vmem:[%s113] sm:$0xff]
        %134 = vset.pattern.permute.xlu0 0
        %135 = vperm.xlu0 %134, %v132
        %v136 = vpop.permute.xlu0 %135
        %138 = vset.pattern.permute.xlu0 63
        %139 = vperm.xlu0 %138, %v132
        %v140 = vpop.permute.xlu0 %139
        %142 = vrot.lane.b32.xlu0 %v132, 12
        %v143 = vpop.permute.xlu0 %142
        %vm145 = vcmask 97280
        %v146 = vsel %vm145, %v136, %v143
        %vm147 = vcmask 621568
        %v148 = vsel %vm147, %v146, %v140
        %150 = vrot.lane.b32.xlu0 %v148, 127
        %v151 = vpop.permute.xlu0 %150
        %v153 = vadd.f32 %v148, %v151
        %155 = vrot.lane.b32.xlu0 %v153, 126
        %v156 = vpop.permute.xlu0 %155
        %v158 = vadd.f32 %v153, %v156
        %160 = vrot.lane.b32.xlu0 %v158, 124
        %v161 = vpop.permute.xlu0 %160
        %v163 = vadd.f32 %v158, %v161
        %165 = vrot.lane.b32.xlu0 %v163, 127
        %v166 = vpop.permute.xlu0 %165
        %v168 = vadd.f32 %v148, %v166
        %169 = vrot.lane.b32.xlu0 %v163, 120
        %v170 = vpop.permute.xlu0 %169
        %v172 = vadd.f32 %v163, %v170
        %174 = vrot.lane.b32.xlu0 %v172, 119
        %v175 = vpop.permute.xlu0 %174
        %v177 = vadd.f32 %v168, %v175
        %v178 = vmul.f32 %v177, 0.04
        %vm179 = vcmask 523264
        %180 = vst.msk [vmem:[%s131] sm:$0xff] %vm179, %v178
        %s181 = sand.u32 %s52, 1
        %s182 = scalar_lea.sflag [#allocation4], %s181
        %s183 = sand.u32 %s52, 1
        %s184 = smul.addr %s183, 8
        %s185 = scalar_lea.vmem [#allocation5], %s184
        // Predicated region
        $region29: #{tpu_custom_call.1} parent=23 // pred_check
          %p186 = pneg %p62
        $region30: #{tpu_custom_call.1} parent=23 // pred_check_branch
          %188 = sbr.rel (%p186) target = $region32
        $region31: #{tpu_custom_call.1} parent=23 // pred_region
          %s190 = ssub.s32 128, 128
          %191 = vsyncadd %s182, %s190
          %s192 = smul.addr %s18, 128
          %s193 = scalar_lea.hbm %s1, %s192
          %s195 = sshll.u32 %s185, 4
          %s196 = int_to_ptr.vmem [resolvable:$true] %s195
          %198 = dma.vmem_to_hbm [thread:$0]  %s196, 128, %s193, %s182
        $region32: #{tpu_custom_call.1} parent=23 // pred_fallthru
          _
      $region24: #{tpu_custom_call.1} parent=5 // pred_fallthru
        _
      %p199 = scmp.le.s32.totalorder 2, %s13
      // Predicated region
      $region33: #{tpu_custom_call.1} parent=5 // pred_check
        %p200 = pneg %p199
      $region34: #{tpu_custom_call.1} parent=5 // pred_check_branch
        %202 = sbr.rel (%p200) target = $region36
      $region35: #{tpu_custom_call.1} parent=5 // pred_region
        %s203 = ssub.s32 %s13, 2
        // Predicated region
        $region37: #{tpu_custom_call.1} parent=35 // pred_check
          %p204 = pneg %p68
        $region38: #{tpu_custom_call.1} parent=35 // pred_check_branch
          %206 = sbr.rel (%p204) target = $region40
        $region39: #{tpu_custom_call.1} parent=35 // pred_region
          %s207 = sand.u32 %s53, 1
          %s208 = scalar_lea.sflag [#allocation4], %s207
          %s209 = sand.u32 %s53, 1
          %s210 = smul.addr %s209, 8
          %s211 = scalar_lea.vmem [#allocation5], %s210
          %212 = dma.done %s208, 128
        $region40: #{tpu_custom_call.1} parent=35 // pred_fallthru
          _
      $region36: #{tpu_custom_call.1} parent=5 // pred_fallthru
        _
    $region6: #{tpu_custom_call.1} parent=1 // loop_footer
      %s17 = sadd.s32 1, %s13
    $region7: #{tpu_custom_call.1} parent=1 // loop_footer_branch
      %12 = sbr.rel target = $region3
    $region8: #{tpu_custom_call.1} parent=1 // loop_exit
      _
    %213 = vsyncpa [#allocation3], 1
    %s214 = scalar_lea.sflag [#allocation3], 1
    %215 = vsyncpa %s214, 1
    %216 = vsyncpa [#allocation4], 1
    %s217 = scalar_lea.sflag [#allocation4], 1
    %218 = vsyncpa %s217, 1

</llo_original>
